<compile_context>
chip_gen: v5e
topology: v5e:2x2
jax: 0.10.0
libtpu: 0.0.40
codegen_flags: <defaults>
</compile_context>

<pallas_src>
import math

import jax
import jax.numpy as jnp
from jax import lax
from jax.experimental import pallas as pl
from jax.experimental.pallas import tpu as pltpu


def _vmem_limit(nbytes):
    """Scoped-VMEM limit: resident bytes + double-buffer/headroom, clamped for v7x."""
    return int(min(2 * nbytes + (8 << 20), 64 << 20))


# --------------------------------------------------------------------------- #
# Single-step GRUCell: one fused K=(I_pad+H) matmul + gates.                  #
# --------------------------------------------------------------------------- #
def gru_cell_kernel(xh_ref, h_ref, w_ref, brz_ref, bin_ref, bhn_ref, out_ref):
    H = h_ref.shape[1]
    h_f32 = h_ref[...].astype(jnp.float32)   # full-precision h for the blend

    # Single K=(I_pad+H) contraction producing [rz_sum | i_n | h_n]: (B, 4H).
    g = jnp.dot(xh_ref[...], w_ref[...], preferred_element_type=jnp.float32)

    rz = jax.nn.sigmoid(g[:, :2 * H] + brz_ref[...])   # b_ir+b_hr, b_iz+b_hz folded
    r = rz[:, :H]
    z = rz[:, H:]
    n = jnp.tanh(g[:, 2 * H:3 * H] + bin_ref[...] + r * (g[:, 3 * H:] + bhn_ref[...]))

    # (1 - z) * n + z * h  ==  n + z * (h - n)
    out_ref[...] = (n + z * (h_f32 - n)).astype(out_ref.dtype)


def prepare_gru_cell_params(w_ih_t, w_hh_t, b_ih, b_hh):
    """Build (once) the fused (I_pad+H, 4H) weight [rz | i_n | h_n] + folded biases."""
    I, threeH = w_ih_t.shape
    H = threeH // 3
    I_pad = ((I + 127) // 128) * 128                 # 128-row padded x block
    dt = w_ih_t.dtype
    w_cat = jnp.zeros((I_pad + H, 4 * H), dt)
    w_cat = w_cat.at[:I, :2 * H].set(w_ih_t[:, :2 * H])                  # x -> r,z
    w_cat = w_cat.at[I_pad:, :2 * H].set(w_hh_t[:, :2 * H].astype(dt))   # h -> r,z
    w_cat = w_cat.at[:I, 2 * H:3 * H].set(w_ih_t[:, 2 * H:])             # x -> i_n
    w_cat = w_cat.at[I_pad:, 3 * H:].set(w_hh_t[:, 2 * H:].astype(dt))   # h -> h_n
    b_rz = (b_ih[:, :2 * H] + b_hh[:, :2 * H]).astype(jnp.float32)
    b_in = b_ih[:, 2 * H:].astype(jnp.float32)
    b_hn = b_hh[:, 2 * H:].astype(jnp.float32)
    return w_cat, b_rz, b_in, b_hn


def _gru_cell_call(x, h, w_cat, b_rz, b_in, b_hn):
    """x: (B, I), h: (B, H), w_cat: (I_pad+H, 4H) from prepare_gru_cell_params."""
    B, H = h.shape
    K = w_cat.shape[0]
    I = x.shape[1]
    i_pad = K - H
    mm_dtype = w_cat.dtype

    # LHS = [x | zero-pad | h]  -> one full-depth MXU contraction in-kernel.
    parts = [x.astype(mm_dtype)]
    if i_pad > I:
        parts.append(jnp.zeros((B, i_pad - I), mm_dtype))
    parts.append(h.astype(mm_dtype))
    xh = jnp.concatenate(parts, axis=1)              # (B, I_pad + H)

    ins = (xh, h, w_cat, b_rz, b_in, b_hn)
    nbytes = sum(a.size * a.dtype.itemsize for a in ins) + B * H * h.dtype.itemsize
    full = lambda a: pl.BlockSpec(a.shape, lambda: (0,) * a.ndim)

    return pl.pallas_call(
        gru_cell_kernel,
        out_shape=jax.ShapeDtypeStruct((B, H), h.dtype),
        in_specs=[full(a) for a in ins],
        out_specs=pl.BlockSpec((B, H), lambda: (0, 0)),
        input_output_aliases={1: 0},                  # h' written in place of h
        compiler_params=pltpu.CompilerParams(vmem_limit_bytes=_vmem_limit(nbytes)),
    )(*ins)


# Donate h at the jit boundary so the alias is a true in-place update.
gru_cell = jax.jit(_gru_cell_call, donate_argnums=(1,))


# --------------------------------------------------------------------------- #
# Fused-sequence kernel: resident W_hh^T, hoisted x-projection, T blocking.   #
# --------------------------------------------------------------------------- #
def gru_seq_kernel(gi_ref, h0_ref, whh_ref, bhn_ref, out_ref, h_c):
    """One timestep BLOCK per grid step.  Only gi blocks stream from HBM;
    W_hh^T / b_hn / h0 have constant block indices (DMA'd once); the hidden
    state is carried across the 'arbitrary' t axis in the VMEM scratch h_c."""
    H = h0_ref.shape[1]
    t_blk = gi_ref.shape[0]
    t = pl.program_id(1)

    @pl.when(t == 0)
    def _():
        h_c[...] = h0_ref[...].astype(jnp.float32)

    whh = whh_ref[...]
    bhn = bhn_ref[...]

    def step(i, h):
        gi = gi_ref[i]                                         # (b_blk, 3H), biases folded
        gh = jnp.dot(h.astype(whh.dtype), whh,
                     preferred_element_type=jnp.float32)       # (b_blk, 3H)
        rz = jax.nn.sigmoid(gi[:, :2 * H] + gh[:, :2 * H])
        r = rz[:, :H]
        z = rz[:, H:]
        n = jnp.tanh(gi[:, 2 * H:] + r * (gh[:, 2 * H:] + bhn))
        return n + z * (h - n)

    h = lax.fori_loop(0, t_blk, step, h_c[...], unroll=True)
    h_c[...] = h

    # Write the output only on the final timestep block (constant block index).
    @pl.when(t == pl.num_programs(1) - 1)
    def _():
        out_ref[...] = h.astype(out_ref.dtype)


def _gru_sequence_call(x_seq, h0, w_ih_t, w_hh_t, b_ih, b_hh, t_blk=16):
    """x_seq: (T, B, I). Returns the final hidden state h_T: (B, H)."""
    T, B, I = x_seq.shape
    H = h0.shape[1]
    mm_dtype = w_ih_t.dtype

    # Bias folding: r/z get (b_i + b_h) and the n gate gets b_in in the hoisted
    # projection; b_hn is applied in-loop (it is gated by r).
    b_fold = jnp.concatenate(
        [b_ih[:, :2 * H] + b_hh[:, :2 * H], b_ih[:, 2 * H:]], axis=1
    ).astype(jnp.float32)
    b_hn = b_hh[:, 2 * H:].astype(jnp.float32)

    # Hoisted input projection: ONE (T*B, I) @ (I, 3H) matmul outside the recurrence.
    x2d = x_seq.reshape(T * B, I).astype(mm_dtype)
    gi_all = (jnp.dot(x2d, w_ih_t, preferred_element_type=jnp.float32)
              .reshape(T, B, 3 * H) + b_fold)                   # (T, B, 3H) f32

    # Timestep blocking: amortize the ~0.35us per-grid-step overhead.
    t_blk = max(1, min(int(t_blk), T))
    while T % t_blk:
        t_blk -= 1

    # Batch blocking: 'parallel' axis so v7x's second TensorCore is used.
    if B > 128 and B % 8 == 0:
        b_blk = 128
        while B % b_blk:
            b_blk -= 8
    else:
        b_blk = B

    blk_bytes = (t_blk * b_blk * 3 * H * 4                # gi block (f32)
                 + b_blk * H * 4                          # h0 block
                 + H * 3 * H * w_hh_t.dtype.itemsize      # resident W_hh^T
                 + H * 4                                  # b_hn
                 + 2 * b_blk * H * 4)                     # out block + h carry scratch

    return pl.pallas_call(
        gru_seq_kernel,
        out_shape=jax.ShapeDtypeStruct((B, H), h0.dtype),
        grid_spec=pltpu.PrefetchScalarGridSpec(
            num_scalar_prefetch=0,
            grid=(B // b_blk, T // t_blk),
            in_specs=[
                pl.BlockSpec((t_blk, b_blk, 3 * H), lambda b, t: (t, b, 0)),  # gi streamed
                pl.BlockSpec((b_blk, H), lambda b, t: (b, 0)),                # h0 (once / b)
                pl.BlockSpec((H, 3 * H), lambda b, t: (0, 0)),                # W_hh^T resident
                pl.BlockSpec((1, H), lambda b, t: (0, 0)),                    # b_hn resident
            ],
            out_specs=pl.BlockSpec((b_blk, H), lambda b, t: (b, 0)),          # final h
            scratch_shapes=[pltpu.VMEM((b_blk, H), jnp.float32)],             # h carry
        ),
        compiler_params=pltpu.CompilerParams(
            dimension_semantics=("parallel", "arbitrary"),   # batch parallel, T sequential
            vmem_limit_bytes=_vmem_limit(blk_bytes),
        ),
    )(gi_all, h0, w_hh_t, b_hn)


gru_sequence = jax.jit(_gru_sequence_call, static_argnames=("t_blk",))


# --------------------------------------------------------------------------- #
# Pure-JAX references (mirror torch.nn.GRUCell).                              #
# --------------------------------------------------------------------------- #
def gru_cell_ref(x, h, w_ih_t, w_hh_t, b_ih, b_hh):
    H = h.shape[1]
    gi = x @ w_ih_t + b_ih
    gh = h @ w_hh_t + b_hh
    i_r, i_z, i_n = gi[:, :H], gi[:, H:2 * H], gi[:, 2 * H:]
    h_r, h_z, h_n = gh[:, :H], gh[:, H:2 * H], gh[:, 2 * H:]
    r = jax.nn.sigmoid(i_r + h_r)
    z = jax.nn.sigmoid(i_z + h_z)
    n = jnp.tanh(i_n + r * h_n)
    return (1.0 - z) * n + z * h


def gru_sequence_ref(x_seq, h0, w_ih_t, w_hh_t, b_ih, b_hh):
    h = h0
    for t in range(x_seq.shape[0]):
        h = gru_cell_ref(x_seq[t], h, w_ih_t, w_hh_t, b_ih, b_hh)
    return h


if __name__ == "__main__":
    # Small shapes consistent with GRUCell(input_dim, hidden_dim).
    B, INPUT_DIM, HIDDEN_DIM, SEQ = 8, 64, 128, 16

    key = jax.random.PRNGKey(0)
    kx, kxs, kh, kwih, kwhh, kbih, kbhh = jax.random.split(key, 7)

    # torch.nn.GRUCell-style init: uniform(-1/sqrt(hidden), 1/sqrt(hidden)).
    bound = 1.0 / math.sqrt(HIDDEN_DIM)
    # PyTorch stores weight_ih: (3H, I); we keep the transposed layout (I, 3H).
    w_ih_t = jax.random.uniform(kwih, (INPUT_DIM, 3 * HIDDEN_DIM), jnp.float32,
                                -bound, bound)
    w_hh_t = jax.random.uniform(kwhh, (HIDDEN_DIM, 3 * HIDDEN_DIM), jnp.float32,
                                -bound, bound)
    b_ih = jax.random.uniform(kbih, (1, 3 * HIDDEN_DIM), jnp.float32, -bound, bound)
    b_hh = jax.random.uniform(kbhh, (1, 3 * HIDDEN_DIM), jnp.float32, -bound, bound)

    x = jax.random.normal(kx, (B, INPUT_DIM), jnp.float32)
    h0 = jax.random.normal(kh, (B, HIDDEN_DIM), jnp.float32)
    x_seq = jax.random.normal(kxs, (SEQ, B, INPUT_DIM), jnp.float32)

    # References.
    ref_step = gru_cell_ref(x, h0, w_ih_t, w_hh_t, b_ih, b_hh)
    ref_seq = gru_sequence_ref(x_seq, h0, w_ih_t, w_hh_t, b_ih, b_hh)

    # 1) Single step, f32 weights (exact module semantics).
    cell_params = prepare_gru_cell_params(w_ih_t, w_hh_t, b_ih, b_hh)
    out = gru_cell(x, jnp.copy(h0), *cell_params)
    out = jax.block_until_ready(out)
    assert out.shape == (B, HIDDEN_DIM)
    assert jnp.allclose(out, ref_step, atol=2e-5, rtol=2e-5), "f32 step mismatch"

    # 2) Single step, bf16 matmul operands (f32 accumulate + f32 gates).
    cell_params_bf16 = prepare_gru_cell_params(
        w_ih_t.astype(jnp.bfloat16), w_hh_t.astype(jnp.bfloat16), b_ih, b_hh)
    out_bf16 = gru_cell(x, jnp.copy(h0), *cell_params_bf16)
    out_bf16 = jax.block_until_ready(out_bf16)
    assert jnp.allclose(out_bf16, ref_step, atol=5e-2, rtol=5e-2), "bf16 step mismatch"

    # 3) Fused sequence (weights VMEM-resident, x-projection hoisted, T-blocked), f32.
    hT = gru_sequence(x_seq, h0, w_ih_t, w_hh_t, b_ih, b_hh)
    hT = jax.block_until_ready(hT)
    assert hT.shape == (B, HIDDEN_DIM)
    assert jnp.allclose(hT, ref_seq, atol=1e-3, rtol=1e-3), "f32 sequence mismatch"

    # 4) Fused sequence with bf16 matmul operands (h carried in f32).
    hT_bf16 = gru_sequence(x_seq, h0,
                           w_ih_t.astype(jnp.bfloat16), w_hh_t.astype(jnp.bfloat16),
                           b_ih, b_hh)
    hT_bf16 = jax.block_until_ready(hT_bf16)
    assert jnp.allclose(hT_bf16, ref_seq, atol=1e-1, rtol=1e-1), "bf16 sequence mismatch"

    print("KERNEL_OK")
</pallas_src>

<mosaic_0001>
module attributes {stable_mosaic.version = 11 : i64} {
  func.func @gru_cell_kernel(%arg0: memref<8x256xf32, #tpu.memory_space<vmem>>, %arg1: memref<8x128xf32, #tpu.memory_space<vmem>>, %arg2: memref<256x512xf32, #tpu.memory_space<vmem>>, %arg3: memref<1x256xf32, #tpu.memory_space<vmem>>, %arg4: memref<1x128xf32, #tpu.memory_space<vmem>>, %arg5: memref<1x128xf32, #tpu.memory_space<vmem>>, %arg6: memref<8x128xf32, #tpu.memory_space<vmem>>) attributes {dimension_semantics = [], scalar_prefetch = 0 : i64, scratch_operands = 0 : i64, tpu.core_type = #tpu.core_type<tc>} {
    %c0 = arith.constant 0 : index
    %c0_0 = arith.constant 0 : index
    %0 = vector.load %arg1[%c0, %c0_0] : memref<8x128xf32, #tpu.memory_space<vmem>>, vector<8x128xf32>
    %c0_1 = arith.constant 0 : index
    %c0_2 = arith.constant 0 : index
    %1 = vector.load %arg0[%c0_1, %c0_2] : memref<8x256xf32, #tpu.memory_space<vmem>>, vector<8x256xf32>
    %c0_3 = arith.constant 0 : index
    %c0_4 = arith.constant 0 : index
    %2 = vector.load %arg2[%c0_3, %c0_4] : memref<256x512xf32, #tpu.memory_space<vmem>>, vector<256x512xf32>
    %cst = arith.constant dense<0.000000e+00> : vector<8x512xf32>
    %3 = tpu.matmul %1, %2, %cst {dimension_numbers = #tpu.dot_dimension_numbers<[1], [0], [0], [1], [0, 0, 1, 1], [], []>} : vector<8x256xf32>, vector<256x512xf32>, vector<8x512xf32> -> vector<8x512xf32>
    %4 = vector.extract_strided_slice %3 {offsets = [0, 0], sizes = [8, 256], strides = [1, 1]} : vector<8x512xf32> to vector<8x256xf32>
    %c0_5 = arith.constant 0 : index
    %c0_6 = arith.constant 0 : index
    %5 = vector.load %arg3[%c0_5, %c0_6] : memref<1x256xf32, #tpu.memory_space<vmem>>, vector<1x256xf32>
    %6 = vector.broadcast %5 : vector<1x256xf32> to vector<8x256xf32>
    %7 = arith.addf %4, %6 : vector<8x256xf32>
    %8 = arith.negf %7 : vector<8x256xf32>
    %9 = math.exp %8 : vector<8x256xf32>
    %cst_7 = arith.constant 1.000000e+00 : f32
    %10 = vector.broadcast %cst_7 : f32 to vector<8x256xf32>
    %11 = arith.addf %10, %9 : vector<8x256xf32>
    %12 = arith.divf %10, %11 : vector<8x256xf32>
    %13 = vector.extract_strided_slice %12 {offsets = [0, 0], sizes = [8, 128], strides = [1, 1]} : vector<8x256xf32> to vector<8x128xf32>
    %14 = vector.extract_strided_slice %12 {offsets = [0, 128], sizes = [8, 128], strides = [1, 1]} : vector<8x256xf32> to vector<8x128xf32>
    %15 = vector.extract_strided_slice %3 {offsets = [0, 256], sizes = [8, 128], strides = [1, 1]} : vector<8x512xf32> to vector<8x128xf32>
    %c0_8 = arith.constant 0 : index
    %c0_9 = arith.constant 0 : index
    %16 = vector.load %arg4[%c0_8, %c0_9] : memref<1x128xf32, #tpu.memory_space<vmem>>, vector<1x128xf32>
    %17 = vector.broadcast %16 : vector<1x128xf32> to vector<8x128xf32>
    %18 = arith.addf %15, %17 : vector<8x128xf32>
    %19 = vector.extract_strided_slice %3 {offsets = [0, 384], sizes = [8, 128], strides = [1, 1]} : vector<8x512xf32> to vector<8x128xf32>
    %c0_10 = arith.constant 0 : index
    %c0_11 = arith.constant 0 : index
    %20 = vector.load %arg5[%c0_10, %c0_11] : memref<1x128xf32, #tpu.memory_space<vmem>>, vector<1x128xf32>
    %21 = vector.broadcast %20 : vector<1x128xf32> to vector<8x128xf32>
    %22 = arith.addf %19, %21 : vector<8x128xf32>
    %23 = arith.mulf %13, %22 : vector<8x128xf32>
    %24 = arith.addf %18, %23 : vector<8x128xf32>
    %25 = math.tanh %24 : vector<8x128xf32>
    %26 = arith.subf %0, %25 : vector<8x128xf32>
    %27 = arith.mulf %14, %26 : vector<8x128xf32>
    %28 = arith.addf %25, %27 : vector<8x128xf32>
    %c0_12 = arith.constant 0 : index
    %c0_13 = arith.constant 0 : index
    %29 = vector.load %arg6[%c0_12, %c0_13] : memref<8x128xf32, #tpu.memory_space<vmem>>, vector<8x128xf32>
    tpu.vector_store %arg6[%c0_12, %c0_13], %28 {strides = array<i32>} : memref<8x128xf32, #tpu.memory_space<vmem>>, vector<8x128xf32>,
    return
  }
}

</mosaic_0001>

<llo_original>
// kernel: _gru_cell_call.1
$region0: #{_gru_cell_call.1}
  #allocation0 [shape = 'u32[]', space=smem, size = 0x4, offset = 0x4, fixed_abs, tag = 'smem constant byte address 0x4 - core index']
  #allocation1 [shape = 'u32[72,128]{1,0:T(1,128)}', space=vmem, size = 0x9000, scoped, tag = 'internal scratch']
  %s0 = inlined_call_operand.vmem [shape: f32[8,256], index: 0, kind: input, shape index: {}]
  %s1 = inlined_call_operand.hbm [shape: f32[8,128], index: 1, kind: input, shape index: {}, may-alias: {1,6}]
  %s2 = inlined_call_operand.hbm [shape: f32[256,512], index: 2, kind: input, shape index: {}]
  %s3 = inlined_call_operand.vmem [shape: f32[1,256], index: 3, kind: input, shape index: {}]
  %s4 = inlined_call_operand.vmem [shape: f32[1,128], index: 4, kind: input, shape index: {}]
  %s5 = inlined_call_operand.vmem [shape: f32[1,128], index: 5, kind: input, shape index: {}]
  %s6 = inlined_call_operand.hbm [shape: f32[8,128], index: 6, kind: output, shape index: {}, may-alias: {1,6}]
  %s7 = sld [smem:[#allocation0]]
  $region42: #{_gru_cell_call.1} parent=0
    _
  %s9 = ssub.s32 1, %s7
  %s10 = scalar_select 0, %s9, %s7
  $region1: #{_gru_cell_call.1} parent=0
    #allocation2 [shape = 'u8[4096]{0}', space=vmem, size = 0x1000, scoped, tag = 'input window, operand 1, single buffered']
    #allocation3 [shape = 's32[1]{0}', space=sflag, size = 0x4, scoped, tag = 'scoped memory for _gru_cell_call.1']
    #allocation4 [shape = 's32[1]{0}', space=sflag, size = 0x4, scoped, tag = 'scoped memory for _gru_cell_call.1']
    #allocation5 [shape = 'u8[524288]{0}', space=vmem, size = 0x80000, scoped, tag = 'input window, operand 2, single buffered']
    #allocation6 [shape = 's32[1]{0}', space=sflag, size = 0x4, scoped, tag = 'scoped memory for _gru_cell_call.1']
    #allocation7 [shape = 'u8[4096]{0}', space=vmem, size = 0x1000, scoped, tag = 'output window, operand 0, single buffered']
    %11 = vsyncpa [#allocation3], 0
    %12 = vsyncpa [#allocation6], 0
    %13 = vsyncpa [#allocation4], 0
    // Predicated region
    $region2: #{_gru_cell_call.1} parent=1 // pred_check
      _
    $region3: #{_gru_cell_call.1} parent=1 // pred_check_branch
      %15 = sbr.rel (0) target = $region5
    $region4: #{_gru_cell_call.1} parent=1 // pred_region
      _
    $region5: #{_gru_cell_call.1} parent=1 // pred_fallthru
      _
    // Predicated region
    $region6: #{_gru_cell_call.1} parent=1 // pred_check
      _
    $region7: #{_gru_cell_call.1} parent=1 // pred_check_branch
      %17 = sbr.rel (0) target = $region9
    $region8: #{_gru_cell_call.1} parent=1 // pred_region
      %19 = vsyncadd [#allocation3], 0
      %s21 = sshll.u32 %s1, 4
      %s22 = int_to_ptr.hbm [resolvable:$true] %s21
      %s23 = sshll.u32 [#allocation2], 4
      %s24 = int_to_ptr.vmem [resolvable:$true] %s23
      %26 = dma.hbm_to_vmem [thread:$0]  %s22, 128, %s24, [#allocation3]
    $region9: #{_gru_cell_call.1} parent=1 // pred_fallthru
      _
    // Predicated region
    $region10: #{_gru_cell_call.1} parent=1 // pred_check
      _
    $region11: #{_gru_cell_call.1} parent=1 // pred_check_branch
      %28 = sbr.rel (0) target = $region13
    $region12: #{_gru_cell_call.1} parent=1 // pred_region
      %30 = vsyncadd [#allocation6], 0
      %s31 = sshll.u32 %s2, 4
      %s32 = int_to_ptr.hbm [resolvable:$true] %s31
      %s33 = sshll.u32 [#allocation5], 4
      %s34 = int_to_ptr.vmem [resolvable:$true] %s33
      %39 = dma.hbm_to_vmem [thread:$0]  %s32, 16384, %s34, [#allocation6], 512, 512, 32
    $region13: #{_gru_cell_call.1} parent=1 // pred_fallthru
      _
    // Predicated region
    $region14: #{_gru_cell_call.1} parent=1 // pred_check
      _
    $region15: #{_gru_cell_call.1} parent=1 // pred_check_branch
      %41 = sbr.rel (0) target = $region17
    $region16: #{_gru_cell_call.1} parent=1 // pred_region
      _
    $region17: #{_gru_cell_call.1} parent=1 // pred_fallthru
      _
    // Predicated region
    $region18: #{_gru_cell_call.1} parent=1 // pred_check
      _
    $region19: #{_gru_cell_call.1} parent=1 // pred_check_branch
      %43 = sbr.rel (0) target = $region21
    $region20: #{_gru_cell_call.1} parent=1 // pred_region
      _
    $region21: #{_gru_cell_call.1} parent=1 // pred_fallthru
      _
    // Predicated region
    $region22: #{_gru_cell_call.1} parent=1 // pred_check
      _
    $region23: #{_gru_cell_call.1} parent=1 // pred_check_branch
      %45 = sbr.rel (0) target = $region25
    $region24: #{_gru_cell_call.1} parent=1 // pred_region
      _
    $region25: #{_gru_cell_call.1} parent=1 // pred_fallthru
      _
    // Predicated region
    $region26: #{_gru_cell_call.1} parent=1 // pred_check
      _
    $region27: #{_gru_cell_call.1} parent=1 // pred_check_branch
      %47 = sbr.rel (0) target = $region29
    $region28: #{_gru_cell_call.1} parent=1 // pred_region
      %49 = dma.done [#allocation3], 128
    $region29: #{_gru_cell_call.1} parent=1 // pred_fallthru
      _
    // Predicated region
    $region30: #{_gru_cell_call.1} parent=1 // pred_check
      _
    $region31: #{_gru_cell_call.1} parent=1 // pred_check_branch
      %51 = sbr.rel (0) target = $region33
    $region32: #{_gru_cell_call.1} parent=1 // pred_region
      %53 = dma.done [#allocation6], 16384
    $region33: #{_gru_cell_call.1} parent=1 // pred_fallthru
      _
    %v54 = vld [vmem:[#allocation2] sm:$0xff]
    %v55 = vld [vmem:[%s0] sm:$0xff]
    %v56 = vld [vmem:[%s0 + $0x8] sm:$0xff]
    %v57 = vld [vmem:[#allocation5] sm:$0xff]
    %v58 = vld [vmem:[#allocation5 + $0x8] sm:$0xff]
    %v59 = vld [vmem:[#allocation5 + $0x10] sm:$0xff]
    %v60 = vld [vmem:[#allocation5 + $0x18] sm:$0xff]
    %v61 = vld [vmem:[#allocation5 + $0x20] sm:$0xff]
    %v62 = vld [vmem:[#allocation5 + $0x28] sm:$0xff]
    %v63 = vld [vmem:[#allocation5 + $0x30] sm:$0xff]
    %v64 = vld [vmem:[#allocation5 + $0x38] sm:$0xff]
    %v65 = vld [vmem:[#allocation5 + $0x40] sm:$0xff]
    %v66 = vld [vmem:[#allocation5 + $0x48] sm:$0xff]
    %v67 = vld [vmem:[#allocation5 + $0x50] sm:$0xff]
    %v68 = vld [vmem:[#allocation5 + $0x58] sm:$0xff]
    %v69 = vld [vmem:[#allocation5 + $0x60] sm:$0xff]
    %v70 = vld [vmem:[#allocation5 + $0x68] sm:$0xff]
    %v71 = vld [vmem:[#allocation5 + $0x70] sm:$0xff]
    %v72 = vld [vmem:[#allocation5 + $0x78] sm:$0xff]
    %v73 = vld [vmem:[#allocation5 + $0x80] sm:$0xff]
    %v74 = vld [vmem:[#allocation5 + $0x88] sm:$0xff]
    %v75 = vld [vmem:[#allocation5 + $0x90] sm:$0xff]
    %v76 = vld [vmem:[#allocation5 + $0x98] sm:$0xff]
    %v77 = vld [vmem:[#allocation5 + $0xa0] sm:$0xff]
    %v78 = vld [vmem:[#allocation5 + $0xa8] sm:$0xff]
    %v79 = vld [vmem:[#allocation5 + $0xb0] sm:$0xff]
    %v80 = vld [vmem:[#allocation5 + $0xb8] sm:$0xff]
    %v81 = vld [vmem:[#allocation5 + $0xc0] sm:$0xff]
    %v82 = vld [vmem:[#allocation5 + $0xc8] sm:$0xff]
    %v83 = vld [vmem:[#allocation5 + $0xd0] sm:$0xff]
    %v84 = vld [vmem:[#allocation5 + $0xd8] sm:$0xff]
    %v85 = vld [vmem:[#allocation5 + $0xe0] sm:$0xff]
    %v86 = vld [vmem:[#allocation5 + $0xe8] sm:$0xff]
    %v87 = vld [vmem:[#allocation5 + $0xf0] sm:$0xff]
    %v88 = vld [vmem:[#allocation5 + $0xf8] sm:$0xff]
    %v89 = vld [vmem:[#allocation5 + $0x100] sm:$0xff]
    %v90 = vld [vmem:[#allocation5 + $0x108] sm:$0xff]
    %v91 = vld [vmem:[#allocation5 + $0x110] sm:$0xff]
    %v92 = vld [vmem:[#allocation5 + $0x118] sm:$0xff]
    %v93 = vld [vmem:[#allocation5 + $0x120] sm:$0xff]
    %v94 = vld [vmem:[#allocation5 + $0x128] sm:$0xff]
    %v95 = vld [vmem:[#allocation5 + $0x130] sm:$0xff]
    %v96 = vld [vmem:[#allocation5 + $0x138] sm:$0xff]
    %v97 = vld [vmem:[#allocation5 + $0x140] sm:$0xff]
    %v98 = vld [vmem:[#allocation5 + $0x148] sm:$0xff]
    %v99 = vld [vmem:[#allocation5 + $0x150] sm:$0xff]
    %v100 = vld [vmem:[#allocation5 + $0x158] sm:$0xff]
    %v101 = vld [vmem:[#allocation5 + $0x160] sm:$0xff]
    %v102 = vld [vmem:[#allocation5 + $0x168] sm:$0xff]
    %v103 = vld [vmem:[#allocation5 + $0x170] sm:$0xff]
    %v104 = vld [vmem:[#allocation5 + $0x178] sm:$0xff]
    %v105 = vld [vmem:[#allocation5 + $0x180] sm:$0xff]
    %v106 = vld [vmem:[#allocation5 + $0x188] sm:$0xff]
    %v107 = vld [vmem:[#allocation5 + $0x190] sm:$0xff]
    %v108 = vld [vmem:[#allocation5 + $0x198] sm:$0xff]
    %v109 = vld [vmem:[#allocation5 + $0x1a0] sm:$0xff]
    %v110 = vld [vmem:[#allocation5 + $0x1a8] sm:$0xff]
    %v111 = vld [vmem:[#allocation5 + $0x1b0] sm:$0xff]
    %v112 = vld [vmem:[#allocation5 + $0x1b8] sm:$0xff]
    %v113 = vld [vmem:[#allocation5 + $0x1c0] sm:$0xff]
    %v114 = vld [vmem:[#allocation5 + $0x1c8] sm:$0xff]
    %v115 = vld [vmem:[#allocation5 + $0x1d0] sm:$0xff]
    %v116 = vld [vmem:[#allocation5 + $0x1d8] sm:$0xff]
    %v117 = vld [vmem:[#allocation5 + $0x1e0] sm:$0xff]
    %v118 = vld [vmem:[#allocation5 + $0x1e8] sm:$0xff]
    %v119 = vld [vmem:[#allocation5 + $0x1f0] sm:$0xff]
    %v120 = vld [vmem:[#allocation5 + $0x1f8] sm:$0xff]
    %v121 = vld [vmem:[#allocation5 + $0x200] sm:$0xff]
    %v122 = vld [vmem:[#allocation5 + $0x208] sm:$0xff]
    %v123 = vld [vmem:[#allocation5 + $0x210] sm:$0xff]
    %v124 = vld [vmem:[#allocation5 + $0x218] sm:$0xff]
    %v125 = vld [vmem:[#allocation5 + $0x220] sm:$0xff]
    %v126 = vld [vmem:[#allocation5 + $0x228] sm:$0xff]
    %v127 = vld [vmem:[#allocation5 + $0x230] sm:$0xff]
    %v128 = vld [vmem:[#allocation5 + $0x238] sm:$0xff]
    %v129 = vld [vmem:[#allocation5 + $0x240] sm:$0xff]
    %v130 = vld [vmem:[#allocation5 + $0x248] sm:$0xff]
    %v131 = vld [vmem:[#allocation5 + $0x250] sm:$0xff]
    %v132 = vld [vmem:[#allocation5 + $0x258] sm:$0xff]
    %v133 = vld [vmem:[#allocation5 + $0x260] sm:$0xff]
    %v134 = vld [vmem:[#allocation5 + $0x268] sm:$0xff]
    %v135 = vld [vmem:[#allocation5 + $0x270] sm:$0xff]
    %v136 = vld [vmem:[#allocation5 + $0x278] sm:$0xff]
    %v137 = vld [vmem:[#allocation5 + $0x280] sm:$0xff]
    %v138 = vld [vmem:[#allocation5 + $0x288] sm:$0xff]
    %v139 = vld [vmem:[#allocation5 + $0x290] sm:$0xff]
    %v140 = vld [vmem:[#allocation5 + $0x298] sm:$0xff]
    %v141 = vld [vmem:[#allocation5 + $0x2a0] sm:$0xff]
    %v142 = vld [vmem:[#allocation5 + $0x2a8] sm:$0xff]
    %v143 = vld [vmem:[#allocation5 + $0x2b0] sm:$0xff]
    %v144 = vld [vmem:[#allocation5 + $0x2b8] sm:$0xff]
    %v145 = vld [vmem:[#allocation5 + $0x2c0] sm:$0xff]
    %v146 = vld [vmem:[#allocation5 + $0x2c8] sm:$0xff]
    %v147 = vld [vmem:[#allocation5 + $0x2d0] sm:$0xff]
    %v148 = vld [vmem:[#allocation5 + $0x2d8] sm:$0xff]
    %v149 = vld [vmem:[#allocation5 + $0x2e0] sm:$0xff]
    %v150 = vld [vmem:[#allocation5 + $0x2e8] sm:$0xff]
    %v151 = vld [vmem:[#allocation5 + $0x2f0] sm:$0xff]
    %v152 = vld [vmem:[#allocation5 + $0x2f8] sm:$0xff]
    %v153 = vld [vmem:[#allocation5 + $0x300] sm:$0xff]
    %v154 = vld [vmem:[#allocation5 + $0x308] sm:$0xff]
    %v155 = vld [vmem:[#allocation5 + $0x310] sm:$0xff]
    %v156 = vld [vmem:[#allocation5 + $0x318] sm:$0xff]
    %v157 = vld [vmem:[#allocation5 + $0x320] sm:$0xff]
    %v158 = vld [vmem:[#allocation5 + $0x328] sm:$0xff]
    %v159 = vld [vmem:[#allocation5 + $0x330] sm:$0xff]
    %v160 = vld [vmem:[#allocation5 + $0x338] sm:$0xff]
    %v161 = vld [vmem:[#allocation5 + $0x340] sm:$0xff]
    %v162 = vld [vmem:[#allocation5 + $0x348] sm:$0xff]
    %v163 = vld [vmem:[#allocation5 + $0x350] sm:$0xff]
    %v164 = vld [vmem:[#allocation5 + $0x358] sm:$0xff]
    %v165 = vld [vmem:[#allocation5 + $0x360] sm:$0xff]
    %v166 = vld [vmem:[#allocation5 + $0x368] sm:$0xff]
    %v167 = vld [vmem:[#allocation5 + $0x370] sm:$0xff]
    %v168 = vld [vmem:[#allocation5 + $0x378] sm:$0xff]
    %v169 = vld [vmem:[#allocation5 + $0x380] sm:$0xff]
    %v170 = vld [vmem:[#allocation5 + $0x388] sm:$0xff]
    %v171 = vld [vmem:[#allocation5 + $0x390] sm:$0xff]
    %v172 = vld [vmem:[#allocation5 + $0x398] sm:$0xff]
    %v173 = vld [vmem:[#allocation5 + $0x3a0] sm:$0xff]
    %v174 = vld [vmem:[#allocation5 + $0x3a8] sm:$0xff]
    %v175 = vld [vmem:[#allocation5 + $0x3b0] sm:$0xff]
    %v176 = vld [vmem:[#allocation5 + $0x3b8] sm:$0xff]
    %v177 = vld [vmem:[#allocation5 + $0x3c0] sm:$0xff]
    %v178 = vld [vmem:[#allocation5 + $0x3c8] sm:$0xff]
    %v179 = vld [vmem:[#allocation5 + $0x3d0] sm:$0xff]
    %v180 = vld [vmem:[#allocation5 + $0x3d8] sm:$0xff]
    %v181 = vld [vmem:[#allocation5 + $0x3e0] sm:$0xff]
    %v182 = vld [vmem:[#allocation5 + $0x3e8] sm:$0xff]
    %v183 = vld [vmem:[#allocation5 + $0x3f0] sm:$0xff]
    %v184 = vld [vmem:[#allocation5 + $0x3f8] sm:$0xff]
    %185 = vmatpush.msra.mxu0 %v117
    %186 = vmatpush.msra.mxu0 %v113
    %187 = vmatpush.msra.mxu0 %v109
    %188 = vmatpush.msra.mxu0 %v105
    %189 = vmatpush.msra.mxu0 %v101
    %190 = vmatpush.msra.mxu0 %v97
    %191 = vmatpush.msra.mxu0 %v93
    %192 = vmatpush.msra.mxu0 %v89
    %193 = vmatpush.msra.mxu0 %v85
    %194 = vmatpush.msra.mxu0 %v81
    %195 = vmatpush.msra.mxu0 %v77
    %196 = vmatpush.msra.mxu0 %v73
    %197 = vmatpush.msra.mxu0 %v69
    %198 = vmatpush.msra.mxu0 %v65
    %199 = vmatpush.msra.mxu0 %v61
    %200 = vmatpush.msra.mxu0 %v57
    %201 = vmatmul.f32.gmra.mxu0 %v55
    %v202 = vpop.f32.mrf.mxu0
    %v203 = vadd.f32 0.0, %v202
    %204 = vdwg.mxu0
    %205 = vmatpush.msra.mxu0 %v181
    %206 = vmatpush.msra.mxu0 %v177
    %207 = vmatpush.msra.mxu0 %v173
    %208 = vmatpush.msra.mxu0 %v169
    %209 = vmatpush.msra.mxu0 %v165
    %210 = vmatpush.msra.mxu0 %v161
    %211 = vmatpush.msra.mxu0 %v157
    %212 = vmatpush.msra.mxu0 %v153
    %213 = vmatpush.msra.mxu0 %v149
    %214 = vmatpush.msra.mxu0 %v145
    %215 = vmatpush.msra.mxu0 %v141
    %216 = vmatpush.msra.mxu0 %v137
    %217 = vmatpush.msra.mxu0 %v133
    %218 = vmatpush.msra.mxu0 %v129
    %219 = vmatpush.msra.mxu0 %v125
    %220 = vmatpush.msra.mxu0 %v121
    %221 = vmatmul.f32.gmra.mxu0 %v56
    %v222 = vpop.f32.mrf.mxu0
    %v223 = vadd.f32 %v203, %v222
    %224 = vdwg.mxu0
    %225 = vmatpush.msra.mxu0 %v118
    %226 = vmatpush.msra.mxu0 %v114
    %227 = vmatpush.msra.mxu0 %v110
    %228 = vmatpush.msra.mxu0 %v106
    %229 = vmatpush.msra.mxu0 %v102
    %230 = vmatpush.msra.mxu0 %v98
    %231 = vmatpush.msra.mxu0 %v94
    %232 = vmatpush.msra.mxu0 %v90
    %233 = vmatpush.msra.mxu0 %v86
    %234 = vmatpush.msra.mxu0 %v82
    %235 = vmatpush.msra.mxu0 %v78
    %236 = vmatpush.msra.mxu0 %v74
    %237 = vmatpush.msra.mxu0 %v70
    %238 = vmatpush.msra.mxu0 %v66
    %239 = vmatpush.msra.mxu0 %v62
    %240 = vmatpush.msra.mxu0 %v58
    %241 = vmatmul.f32.gmra.mxu0 %v55
    %v242 = vpop.f32.mrf.mxu0
    %v243 = vadd.f32 0.0, %v242
    %244 = vdwg.mxu0
    %245 = vmatpush.msra.mxu0 %v182
    %246 = vmatpush.msra.mxu0 %v178
    %247 = vmatpush.msra.mxu0 %v174
    %248 = vmatpush.msra.mxu0 %v170
    %249 = vmatpush.msra.mxu0 %v166
    %250 = vmatpush.msra.mxu0 %v162
    %251 = vmatpush.msra.mxu0 %v158
    %252 = vmatpush.msra.mxu0 %v154
    %253 = vmatpush.msra.mxu0 %v150
    %254 = vmatpush.msra.mxu0 %v146
    %255 = vmatpush.msra.mxu0 %v142
    %256 = vmatpush.msra.mxu0 %v138
    %257 = vmatpush.msra.mxu0 %v134
    %258 = vmatpush.msra.mxu0 %v130
    %259 = vmatpush.msra.mxu0 %v126
    %260 = vmatpush.msra.mxu0 %v122
    %261 = vmatmul.f32.gmra.mxu0 %v56
    %v262 = vpop.f32.mrf.mxu0
    %v263 = vadd.f32 %v243, %v262
    %264 = vdwg.mxu0
    %265 = vmatpush.msra.mxu0 %v119
    %266 = vmatpush.msra.mxu0 %v115
    %267 = vmatpush.msra.mxu0 %v111
    %268 = vmatpush.msra.mxu0 %v107
    %269 = vmatpush.msra.mxu0 %v103
    %270 = vmatpush.msra.mxu0 %v99
    %271 = vmatpush.msra.mxu0 %v95
    %272 = vmatpush.msra.mxu0 %v91
    %273 = vmatpush.msra.mxu0 %v87
    %274 = vmatpush.msra.mxu0 %v83
    %275 = vmatpush.msra.mxu0 %v79
    %276 = vmatpush.msra.mxu0 %v75
    %277 = vmatpush.msra.mxu0 %v71
    %278 = vmatpush.msra.mxu0 %v67
    %279 = vmatpush.msra.mxu0 %v63
    %280 = vmatpush.msra.mxu0 %v59
    %281 = vmatmul.f32.gmra.mxu0 %v55
    %v282 = vpop.f32.mrf.mxu0
    %v283 = vadd.f32 0.0, %v282
    %284 = vdwg.mxu0
    %285 = vmatpush.msra.mxu0 %v183
    %286 = vmatpush.msra.mxu0 %v179
    %287 = vmatpush.msra.mxu0 %v175
    %288 = vmatpush.msra.mxu0 %v171
    %289 = vmatpush.msra.mxu0 %v167
    %290 = vmatpush.msra.mxu0 %v163
    %291 = vmatpush.msra.mxu0 %v159
    %292 = vmatpush.msra.mxu0 %v155
    %293 = vmatpush.msra.mxu0 %v151
    %294 = vmatpush.msra.mxu0 %v147
    %295 = vmatpush.msra.mxu0 %v143
    %296 = vmatpush.msra.mxu0 %v139
    %297 = vmatpush.msra.mxu0 %v135
    %298 = vmatpush.msra.mxu0 %v131
    %299 = vmatpush.msra.mxu0 %v127
    %300 = vmatpush.msra.mxu0 %v123
    %301 = vmatmul.f32.gmra.mxu0 %v56
    %v302 = vpop.f32.mrf.mxu0
    %v303 = vadd.f32 %v283, %v302
    %304 = vdwg.mxu0
    %305 = vmatpush.msra.mxu0 %v120
    %306 = vmatpush.msra.mxu0 %v116
    %307 = vmatpush.msra.mxu0 %v112
    %308 = vmatpush.msra.mxu0 %v108
    %309 = vmatpush.msra.mxu0 %v104
    %310 = vmatpush.msra.mxu0 %v100
    %311 = vmatpush.msra.mxu0 %v96
    %312 = vmatpush.msra.mxu0 %v92
    %313 = vmatpush.msra.mxu0 %v88
    %314 = vmatpush.msra.mxu0 %v84
    %315 = vmatpush.msra.mxu0 %v80
    %316 = vmatpush.msra.mxu0 %v76
    %317 = vmatpush.msra.mxu0 %v72
    %318 = vmatpush.msra.mxu0 %v68
    %319 = vmatpush.msra.mxu0 %v64
    %320 = vmatpush.msra.mxu0 %v60
    %321 = vmatmul.f32.gmra.mxu0 %v55
    %v322 = vpop.f32.mrf.mxu0
    %v323 = vadd.f32 0.0, %v322
    %324 = vdwg.mxu0
    %325 = vmatpush.msra.mxu0 %v184
    %326 = vmatpush.msra.mxu0 %v180
    %327 = vmatpush.msra.mxu0 %v176
    %328 = vmatpush.msra.mxu0 %v172
    %329 = vmatpush.msra.mxu0 %v168
    %330 = vmatpush.msra.mxu0 %v164
    %331 = vmatpush.msra.mxu0 %v160
    %332 = vmatpush.msra.mxu0 %v156
    %333 = vmatpush.msra.mxu0 %v152
    %334 = vmatpush.msra.mxu0 %v148
    %335 = vmatpush.msra.mxu0 %v144
    %336 = vmatpush.msra.mxu0 %v140
    %337 = vmatpush.msra.mxu0 %v136
    %338 = vmatpush.msra.mxu0 %v132
    %339 = vmatpush.msra.mxu0 %v128
    %340 = vmatpush.msra.mxu0 %v124
    %341 = vmatmul.f32.gmra.mxu0 %v56
    %v342 = vpop.f32.mrf.mxu0
    %v343 = vadd.f32 %v323, %v342
    %344 = vdwg.mxu0
    %v345 = vld [vmem:[%s3] sm:$0x3]
    %v347 = vperm.slane %v345, 0
    %v348 = vperm.slane %v345, 1
    %v351 = vadd.f32 %v223, %v347
    %v352 = vadd.f32 %v263, %v348
    %v353 = vxor.u32 %v351, 2147483648
    %v354 = vxor.u32 %v352, 2147483648
    %v355 = vmul.f32 %v353, 1.442695
    %v356 = vpow.pop %v355
    %v357 = vmul.f32 %v354, 1.442695
    %v358 = vpow.pop %v357
    %v359 = vadd.f32 %v356, 1.0
    %v360 = vadd.f32 %v358, 1.0
    %v361 = vrcp.pop %v359
    %v362 = vmul.f32 %v359, %v361
    %v363 = vsub.f32 1.0, %v362
    %v364 = vmul.f32 %v361, %v363
    %v365 = vadd.f32 %v361, %v364
    %vm366 = vweird.f32 %v359
    %vm367 = vweird.f32 %v361
    %vm368 = vmor %vm366, %vm367
    %v369 = vsel %vm368, %v361, %v365
    %v370 = vand.u32 2147483647, %v359
    %vm371 = vcmp.eq.f32.partialorder %v370, 8.507059e+37
    %v372 = vand.u32 %v359, 2147483648
    %v373 = vor.u32 1.1754944e-38, %v372
    %v374 = vsel %vm371, %v373, %v369
    %v375 = vmul.f32 1.0, %v374
    %v376 = vrcp.pop %v360
    %v377 = vmul.f32 %v360, %v376
    %v378 = vsub.f32 1.0, %v377
    %v379 = vmul.f32 %v376, %v378
    %v380 = vadd.f32 %v376, %v379
    %vm381 = vweird.f32 %v360
    %vm382 = vweird.f32 %v376
    %vm383 = vmor %vm381, %vm382
    %v384 = vsel %vm383, %v376, %v380
    %v385 = vand.u32 2147483647, %v360
    %vm386 = vcmp.eq.f32.partialorder %v385, 8.507059e+37
    %v387 = vand.u32 %v360, 2147483648
    %v388 = vor.u32 1.1754944e-38, %v387
    %v389 = vsel %vm386, %v388, %v384
    %v390 = vmul.f32 1.0, %v389
    %v391 = vld [vmem:[%s4] sm:$0x1]
    %v393 = vperm.slane %v391, 0
    %v395 = vadd.f32 %v303, %v393
    %v396 = vld [vmem:[%s5] sm:$0x1]
    %v398 = vperm.slane %v396, 0
    %v400 = vadd.f32 %v343, %v398
    %v401 = vmul.f32 %v375, %v400
    %v402 = vadd.f32 %v395, %v401
    %v403 = vtanh.pop %v402
    %v404 = vsub.f32 %v54, %v403
    %v405 = vmul.f32 %v390, %v404
    %v406 = vadd.f32 %v403, %v405
    %407 = vst [vmem:[#allocation7] sm:$0xff] %v406
    // Predicated region
    $region34: #{_gru_cell_call.1} parent=1 // pred_check
      _
    $region35: #{_gru_cell_call.1} parent=1 // pred_check_branch
      %409 = sbr.rel (0) target = $region37
    $region36: #{_gru_cell_call.1} parent=1 // pred_region
      %411 = vsyncadd [#allocation4], 0
      %s413 = sshll.u32 [#allocation7], 4
      %s414 = int_to_ptr.vmem [resolvable:$true] %s413
      %s415 = sshll.u32 %s6, 4
      %s416 = int_to_ptr.hbm [resolvable:$true] %s415
      %418 = dma.vmem_to_hbm [thread:$0]  %s414, 128, %s416, [#allocation4]
    $region37: #{_gru_cell_call.1} parent=1 // pred_fallthru
      _
    // Predicated region
    $region38: #{_gru_cell_call.1} parent=1 // pred_check
      _
    $region39: #{_gru_cell_call.1} parent=1 // pred_check_branch
      %420 = sbr.rel (0) target = $region41
    $region40: #{_gru_cell_call.1} parent=1 // pred_region
      %422 = dma.done [#allocation4], 128
    $region41: #{_gru_cell_call.1} parent=1 // pred_fallthru
      _
    %423 = vsyncpa [#allocation3], 1
    %424 = vsyncpa [#allocation6], 1
    %425 = vsyncpa [#allocation4], 1

</llo_original>
